<compile_context>
chip_gen: v6e
topology: v6e:2x2x1
jax: 0.10.0
libtpu: 0.0.40
codegen_flags: <defaults>
</compile_context>

<pallas_src>
import jax
import jax.numpy as jnp
from jax.experimental import pallas as pl
from jax.experimental.pallas import tpu as pltpu

_LANES = 512            # lane-dense last dim: multiple of 128 and of F=4
_MAX_BLOCK_ROWS = 512   # 512x512 f32 block = 1 MiB; safe on v5e/v6e/v7x
_SMALL_N = 4096         # below this many elements, plain jnp beats the launch


def _scaler_kernel(x_ref, mins_ref, scale_ref, o_ref):
    # Pure VPU elementwise: (x - mins) * precomputed 1/(maxs - mins).
    # mins_ref / scale_ref are (1, _LANES) constant rows, resident across the
    # whole grid (index_map always returns (0, 0)), broadcast over block rows.
    o_ref[...] = (x_ref[...] - mins_ref[...]) * scale_ref[...]


def scaler_forward(x, mins, maxs, *, force_pallas=False):
    """Computes (x - mins) / (maxs - mins), mins/maxs broadcast over x[..., F]."""
    orig_shape = x.shape
    F = mins.shape[0]
    assert orig_shape[-1] == F, "last axis of x must match mins/maxs length"
    assert _LANES % F == 0

    mins = mins.astype(x.dtype)
    # Fold the divide into a constant reciprocal scale (4 elements -> free).
    scale = (1.0 / (maxs.astype(x.dtype) - mins))

    flat = x.reshape(-1)
    n = flat.shape[0]

    if n < _SMALL_N and not force_pallas:
        # Tiny input: pallas_call launch + per-step overhead dwarfs the work;
        # let XLA fuse the elementwise op into its neighbors.
        return ((x - mins) * scale).reshape(orig_shape)

    # ---- lane-dense view: (rows, _LANES) with _LANES a multiple of F --------
    # Feature id of flat element k is k % F; since _LANES % F == 0, a single
    # tiled (1, _LANES) constant row broadcasts correctly to every row.
    rows = pl.cdiv(n, _LANES)
    block_rows = min(_MAX_BLOCK_ROWS, ((rows + 7) // 8) * 8)   # (8,128)-aligned
    rows_pad = pl.cdiv(rows, block_rows) * block_rows
    n_pad = rows_pad * _LANES

    flat = jnp.pad(flat, (0, n_pad - n))   # padded tail is sliced off below
    x2d = flat.reshape(rows_pad, _LANES)

    reps = _LANES // F
    mins_row = jnp.tile(mins, reps).reshape(1, _LANES)
    scale_row = jnp.tile(scale, reps).reshape(1, _LANES)

    grid = (rows_pad // block_rows,)
    out2d = pl.pallas_call(
        _scaler_kernel,
        out_shape=jax.ShapeDtypeStruct((rows_pad, _LANES), x.dtype),
        grid_spec=pltpu.PrefetchScalarGridSpec(
            num_scalar_prefetch=0,
            grid=grid,
            in_specs=[
                pl.BlockSpec((block_rows, _LANES), lambda i: (i, 0)),
                pl.BlockSpec((1, _LANES), lambda i: (0, 0)),  # mins (resident)
                pl.BlockSpec((1, _LANES), lambda i: (0, 0)),  # scale (resident)
            ],
            out_specs=pl.BlockSpec((block_rows, _LANES), lambda i: (i, 0)),
        ),
        compiler_params=pltpu.CompilerParams(
            # Memory-bound streaming op: shard grid steps across both v7x TCs;
            # harmless no-op on single-TC v5e/v6e.
            dimension_semantics=("parallel",),
        ),
    )(x2d, mins_row, scale_row)

    return out2d.reshape(-1)[:n].reshape(orig_shape)


if __name__ == "__main__":
    # Deterministic buffers exactly as in the PyTorch module __init__.
    mins = jnp.array([200000.0, 300000.0, 2.0, 300.0], dtype=jnp.float32)
    maxs = jnp.array([9900000.0, 39500000.0, 20.0, 900.0], dtype=jnp.float32)

    key = jax.random.PRNGKey(0)
    k1, k2 = jax.random.split(key)

    # Small case (batch=8, features=4): exercises the tiny-input fast path.
    u_small = jax.random.uniform(k1, (8, 4), dtype=jnp.float32)
    x_small = mins + u_small * (maxs - mins)
    out_small = jax.block_until_ready(scaler_forward(x_small, mins, maxs))
    ref_small = (x_small - mins) / (maxs - mins)
    assert jnp.allclose(out_small, ref_small, rtol=1e-6, atol=1e-6), \
        "small-path mismatch vs reference"

    # Moderate case (batch=2048, features=4): goes through the lane-dense
    # Pallas kernel (still small: 32 KiB of input).
    u = jax.random.uniform(k2, (2048, 4), dtype=jnp.float32)
    x = mins + u * (maxs - mins)
    out = jax.block_until_ready(scaler_forward(x, mins, maxs))
    ref = (x - mins) / (maxs - mins)
    assert jnp.allclose(out, ref, rtol=1e-6, atol=1e-6), \
        "pallas-path mismatch vs reference"

    print("KERNEL_OK")
</pallas_src>

<mosaic_0001>
module attributes {stable_mosaic.version = 11 : i64} {
  func.func @_scaler_kernel(%arg0: i32, %arg1: memref<16x512xf32, #tpu.memory_space<vmem>>, %arg2: memref<1x512xf32, #tpu.memory_space<vmem>>, %arg3: memref<1x512xf32, #tpu.memory_space<vmem>>, %arg4: memref<16x512xf32, #tpu.memory_space<vmem>>) attributes {dimension_semantics = [#tpu.dimension_semantics<parallel>], iteration_bounds = array<i64: 1>, scalar_prefetch = 0 : i64, scratch_operands = 0 : i64, tpu.core_type = #tpu.core_type<tc>, window_params = [{transform_indices = @transform_0, window_bounds = array<i64: 16, 512>}, {pipeline_mode = #tpu.pipeline_mode<synchronous>, transform_indices = @transform_1, window_bounds = array<i64: 1, 512>}, {pipeline_mode = #tpu.pipeline_mode<synchronous>, transform_indices = @transform_2, window_bounds = array<i64: 1, 512>}, {transform_indices = @transform_3, window_bounds = array<i64: 16, 512>}]} {
    %c0 = arith.constant 0 : index
    %c0_0 = arith.constant 0 : index
    %0 = vector.load %arg1[%c0, %c0_0] : memref<16x512xf32, #tpu.memory_space<vmem>>, vector<16x512xf32>
    %c0_1 = arith.constant 0 : index
    %c0_2 = arith.constant 0 : index
    %1 = vector.load %arg2[%c0_1, %c0_2] : memref<1x512xf32, #tpu.memory_space<vmem>>, vector<1x512xf32>
    %2 = vector.broadcast %1 : vector<1x512xf32> to vector<16x512xf32>
    %3 = arith.subf %0, %2 : vector<16x512xf32>
    %c0_3 = arith.constant 0 : index
    %c0_4 = arith.constant 0 : index
    %4 = vector.load %arg3[%c0_3, %c0_4] : memref<1x512xf32, #tpu.memory_space<vmem>>, vector<1x512xf32>
    %5 = vector.broadcast %4 : vector<1x512xf32> to vector<16x512xf32>
    %6 = arith.mulf %3, %5 : vector<16x512xf32>
    %c0_5 = arith.constant 0 : index
    %c0_6 = arith.constant 0 : index
    %7 = vector.load %arg4[%c0_5, %c0_6] : memref<16x512xf32, #tpu.memory_space<vmem>>, vector<16x512xf32>
    tpu.vector_store %arg4[%c0_5, %c0_6], %6 {strides = array<i32>} : memref<16x512xf32, #tpu.memory_space<vmem>>, vector<16x512xf32>,
    return
  }
  func.func @transform_0(%arg0: i32) -> (i32, i32) {
    %c0_i32 = arith.constant 0 : i32
    %c0_i32_0 = arith.constant 0 : i32
    return %arg0, %c0_i32 : i32, i32
  }
  func.func @transform_1(%arg0: i32) -> (i32, i32) {
    %c0_i32 = arith.constant 0 : i32
    %c0_i32_0 = arith.constant 0 : i32
    %c0_i32_1 = arith.constant 0 : i32
    return %c0_i32, %c0_i32_0 : i32, i32
  }
  func.func @transform_2(%arg0: i32) -> (i32, i32) {
    %c0_i32 = arith.constant 0 : i32
    %c0_i32_0 = arith.constant 0 : i32
    %c0_i32_1 = arith.constant 0 : i32
    return %c0_i32, %c0_i32_0 : i32, i32
  }
  func.func @transform_3(%arg0: i32) -> (i32, i32) {
    %c0_i32 = arith.constant 0 : i32
    %c0_i32_0 = arith.constant 0 : i32
    return %arg0, %c0_i32 : i32, i32
  }
}

</mosaic_0001>

<llo_original>
// kernel: tpu_custom_call.1
$region0: #{tpu_custom_call.1}
  #allocation0 [shape = 'u32[]', space=smem, size = 0x4, offset = 0x4, fixed_abs, tag = 'smem constant byte address 0x4 - core index']
  #allocation1 [shape = 'u32[144,128]{1,0:T(1,128)}', space=vmem, size = 0x12000, scoped, tag = 'internal scratch']
  %s0 = inlined_call_operand.hbm [shape: f32[16,512], index: 0, kind: input, shape index: {}]
  %s1 = inlined_call_operand.hbm [shape: f32[1,512], index: 1, kind: input, shape index: {}]
  %s2 = inlined_call_operand.hbm [shape: f32[1,512], index: 2, kind: input, shape index: {}]
  %s3 = inlined_call_operand.hbm [shape: f32[16,512], index: 3, kind: output, shape index: {}]
  %s4 = sld [smem:[#allocation0]]
  $region34: #{tpu_custom_call.1} parent=0
    _
  %s6 = ssub.s32 1, %s4
  %s7 = scalar_select 0, %s6, %s4
  $region1: #{tpu_custom_call.1} parent=0
    #allocation2 [shape = 'u8[32768]{0}', space=vmem, size = 0x8000, scoped, tag = 'input window, operand 0, single buffered']
    #allocation3 [shape = 's32[1]{0}', space=sflag, size = 0x4, scoped, tag = 'scoped memory for tpu_custom_call.1']
    #allocation4 [shape = 's32[1]{0}', space=sflag, size = 0x4, scoped, tag = 'scoped memory for tpu_custom_call.1']
    #allocation5 [shape = 'u8[2048]{0}', space=vmem, size = 0x800, scoped, tag = 'input window, operand 1, single buffered']
    #allocation6 [shape = 's32[1]{0}', space=sflag, size = 0x4, scoped, tag = 'scoped memory for tpu_custom_call.1']
    #allocation7 [shape = 'u8[2048]{0}', space=vmem, size = 0x800, scoped, tag = 'input window, operand 2, single buffered']
    #allocation8 [shape = 'u8[32768]{0}', space=vmem, size = 0x8000, scoped, tag = 'output window, operand 0, single buffered']
    %8 = vsyncpa [#allocation3], 0
    %9 = vsyncpa [#allocation6], 0
    %10 = vsyncpa [#allocation4], 0
    // Predicated region
    $region2: #{tpu_custom_call.1} parent=1 // pred_check
      _
    $region3: #{tpu_custom_call.1} parent=1 // pred_check_branch
      %12 = sbr.rel (0) target = $region5
    $region4: #{tpu_custom_call.1} parent=1 // pred_region
      %s14 = ssub.s32 1024, 1024
      %15 = vsyncadd [#allocation3], %s14
      %s16 = sshll.u32 [#allocation2], 4
      %s17 = int_to_ptr.vmem [resolvable:$true] %s16
      %22 = dma.hbm_to_vmem [thread:$0]  %s0, 1024, %s17, [#allocation3], 512, 512, 32
    $region5: #{tpu_custom_call.1} parent=1 // pred_fallthru
      _
    // Predicated region
    $region6: #{tpu_custom_call.1} parent=1 // pred_check
      _
    $region7: #{tpu_custom_call.1} parent=1 // pred_check_branch
      %24 = sbr.rel (0) target = $region9
    $region8: #{tpu_custom_call.1} parent=1 // pred_region
      %s26 = ssub.s32 64, 64
      %27 = vsyncadd [#allocation6], %s26
      %s29 = sshll.u32 [#allocation5], 4
      %s30 = int_to_ptr.vmem [resolvable:$true] %s29
      %32 = dma.hbm_to_vmem [thread:$0]  %s1, 64, %s30, [#allocation6]
    $region9: #{tpu_custom_call.1} parent=1 // pred_fallthru
      _
    // Predicated region
    $region10: #{tpu_custom_call.1} parent=1 // pred_check
      _
    $region11: #{tpu_custom_call.1} parent=1 // pred_check_branch
      %34 = sbr.rel (0) target = $region13
    $region12: #{tpu_custom_call.1} parent=1 // pred_region
      %s36 = ssub.s32 64, 64
      %37 = vsyncadd [#allocation6], %s36
      %s39 = sshll.u32 [#allocation7], 4
      %s40 = int_to_ptr.vmem [resolvable:$true] %s39
      %42 = dma.hbm_to_vmem [thread:$0]  %s2, 64, %s40, [#allocation6]
    $region13: #{tpu_custom_call.1} parent=1 // pred_fallthru
      _
    // Predicated region
    $region14: #{tpu_custom_call.1} parent=1 // pred_check
      _
    $region15: #{tpu_custom_call.1} parent=1 // pred_check_branch
      %44 = sbr.rel (0) target = $region17
    $region16: #{tpu_custom_call.1} parent=1 // pred_region
      %45 = dma.done [#allocation3], 1024
    $region17: #{tpu_custom_call.1} parent=1 // pred_fallthru
      _
    // Predicated region
    $region18: #{tpu_custom_call.1} parent=1 // pred_check
      _
    $region19: #{tpu_custom_call.1} parent=1 // pred_check_branch
      %47 = sbr.rel (0) target = $region21
    $region20: #{tpu_custom_call.1} parent=1 // pred_region
      %48 = dma.done [#allocation6], 64
    $region21: #{tpu_custom_call.1} parent=1 // pred_fallthru
      _
    // Predicated region
    $region22: #{tpu_custom_call.1} parent=1 // pred_check
      _
    $region23: #{tpu_custom_call.1} parent=1 // pred_check_branch
      %50 = sbr.rel (0) target = $region25
    $region24: #{tpu_custom_call.1} parent=1 // pred_region
      %51 = dma.done [#allocation6], 64
    $region25: #{tpu_custom_call.1} parent=1 // pred_fallthru
      _
    %v52 = vld [vmem:[#allocation2] sm:$0xff]
    %v53 = vld [vmem:[#allocation2 + $0x8] sm:$0xff]
    %v54 = vld [vmem:[#allocation2 + $0x10] sm:$0xff]
    %v55 = vld [vmem:[#allocation2 + $0x18] sm:$0xff]
    %v56 = vld [vmem:[#allocation2 + $0x20] sm:$0xff]
    %v57 = vld [vmem:[#allocation2 + $0x28] sm:$0xff]
    %v58 = vld [vmem:[#allocation2 + $0x30] sm:$0xff]
    %v59 = vld [vmem:[#allocation2 + $0x38] sm:$0xff]
    %v60 = vld [vmem:[#allocation5] sm:$0xf]
    %v62 = vlaneseq
    %v63 = vshrl.u32 %v62, 7
    %v64 = vsub.s32 0, %v63
    %v65 = vrot.slane %v60, %v64
    %v66 = vlaneseq
    %v67 = vshrl.u32 %v66, 7
    %v68 = vsub.s32 1, %v67
    %v69 = vrot.slane %v60, %v68
    %v70 = vlaneseq
    %v71 = vshrl.u32 %v70, 7
    %v72 = vsub.s32 2, %v71
    %v73 = vrot.slane %v60, %v72
    %v74 = vlaneseq
    %v75 = vshrl.u32 %v74, 7
    %v76 = vsub.s32 3, %v75
    %v77 = vrot.slane %v60, %v76
    %v82 = vsub.f32 %v52, %v65
    %v83 = vsub.f32 %v53, %v69
    %v84 = vsub.f32 %v54, %v73
    %v85 = vsub.f32 %v55, %v77
    %v86 = vsub.f32 %v56, %v65
    %v87 = vsub.f32 %v57, %v69
    %v88 = vsub.f32 %v58, %v73
    %v89 = vsub.f32 %v59, %v77
    %v90 = vld [vmem:[#allocation7] sm:$0xf]
    %v92 = vlaneseq
    %v93 = vshrl.u32 %v92, 7
    %v94 = vsub.s32 0, %v93
    %v95 = vrot.slane %v90, %v94
    %v96 = vlaneseq
    %v97 = vshrl.u32 %v96, 7
    %v98 = vsub.s32 1, %v97
    %v99 = vrot.slane %v90, %v98
    %v100 = vlaneseq
    %v101 = vshrl.u32 %v100, 7
    %v102 = vsub.s32 2, %v101
    %v103 = vrot.slane %v90, %v102
    %v104 = vlaneseq
    %v105 = vshrl.u32 %v104, 7
    %v106 = vsub.s32 3, %v105
    %v107 = vrot.slane %v90, %v106
    %v112 = vmul.f32 %v82, %v95
    %v113 = vmul.f32 %v83, %v99
    %v114 = vmul.f32 %v84, %v103
    %v115 = vmul.f32 %v85, %v107
    %v116 = vmul.f32 %v86, %v95
    %v117 = vmul.f32 %v87, %v99
    %v118 = vmul.f32 %v88, %v103
    %v119 = vmul.f32 %v89, %v107
    %120 = vst [vmem:[#allocation8] sm:$0xff] %v112
    %121 = vst [vmem:[#allocation8 + $0x8] sm:$0xff] %v113
    %122 = vst [vmem:[#allocation8 + $0x10] sm:$0xff] %v114
    %123 = vst [vmem:[#allocation8 + $0x18] sm:$0xff] %v115
    %124 = vst [vmem:[#allocation8 + $0x20] sm:$0xff] %v116
    %125 = vst [vmem:[#allocation8 + $0x28] sm:$0xff] %v117
    %126 = vst [vmem:[#allocation8 + $0x30] sm:$0xff] %v118
    %127 = vst [vmem:[#allocation8 + $0x38] sm:$0xff] %v119
    // Predicated region
    $region26: #{tpu_custom_call.1} parent=1 // pred_check
      _
    $region27: #{tpu_custom_call.1} parent=1 // pred_check_branch
      %129 = sbr.rel (0) target = $region29
    $region28: #{tpu_custom_call.1} parent=1 // pred_region
      %s131 = ssub.s32 1024, 1024
      %132 = vsyncadd [#allocation4], %s131
      %s133 = sshll.u32 [#allocation8], 4
      %s134 = int_to_ptr.vmem [resolvable:$true] %s133
      %139 = dma.vmem_to_hbm [thread:$0]  %s134, 1024, %s3, [#allocation4], 512, 512, 32
    $region29: #{tpu_custom_call.1} parent=1 // pred_fallthru
      _
    // Predicated region
    $region30: #{tpu_custom_call.1} parent=1 // pred_check
      _
    $region31: #{tpu_custom_call.1} parent=1 // pred_check_branch
      %141 = sbr.rel (0) target = $region33
    $region32: #{tpu_custom_call.1} parent=1 // pred_region
      %142 = dma.done [#allocation4], 1024
    $region33: #{tpu_custom_call.1} parent=1 // pred_fallthru
      _
    %143 = vsyncpa [#allocation3], 1
    %144 = vsyncpa [#allocation6], 1
    %145 = vsyncpa [#allocation4], 1

</llo_original>
